<compile_context>
chip_gen: v7x
topology: tpu7x:2x2x1
jax: 0.10.0
libtpu: 0.0.40
codegen_flags: <defaults>
</compile_context>

<pallas_src>
import jax
import jax.numpy as jnp
from jax.experimental import pallas as pl
from jax.experimental.pallas import tpu as pltpu


_VMEM_SPEC = pl.BlockSpec(memory_space=pltpu.MemorySpace.VMEM)


def _round_up(x, m):
    return ((x + m - 1) // m) * m


# ----------------- trunk kernel (batch-independent, runs once) ----------------

def _trunk_kernel(xt_ref, tw1_ref, tb1_ref, tw2_ref, tb2_ref, ot_ref):
    """ot = relu(xt @ TW1 + tb1) @ TW2_nxminor + tb2_nxminor  -> (1, p*nx)."""
    ht = jnp.dot(xt_ref[...], tw1_ref[...],
                 preferred_element_type=jnp.float32) + tb1_ref[...]
    ht = jnp.maximum(ht, 0.0)
    ot = jnp.dot(ht, tw2_ref[...],
                 preferred_element_type=jnp.float32) + tb2_ref[...]
    ot_ref[...] = ot.astype(ot_ref.dtype)


# -------------- branch MLP + contraction (batched over grid rows) -------------

def _branch_contract_kernel(xb_ref, bw1_ref, bb1_ref, bw2_ref, bb2_ref,
                            ot_ref, o_ref):
    """out = (relu(xb@BW1+bb1)@BW2+bb2) contracted against the precomputed trunk.

    ot_ref holds the trunk output in nx-minor layout, shape (1, p*nx).  The
    'bi,ni->bn' contraction (K = p, tiny) is done as p broadcast FMAs on the VPU
    instead of a scratch relayout + K=8 MXU matmul.
    """
    hb = jnp.dot(xb_ref[...], bw1_ref[...],
                 preferred_element_type=jnp.float32) + bb1_ref[...]
    hb = jnp.maximum(hb, 0.0)
    ob = jnp.dot(hb, bw2_ref[...],
                 preferred_element_type=jnp.float32) + bb2_ref[...]      # (bB, p)

    nx = o_ref.shape[-1]
    p = ot_ref.shape[-1] // nx
    ot = ot_ref[...]                                                     # (1, p*nx)

    acc = ob[:, 0:1] * ot[:, 0:nx]                                       # (bB, nx)
    for i in range(1, p):                         # small static unroll (p = 8)
        acc = acc + ob[:, i:i + 1] * ot[:, i * nx:(i + 1) * nx]
    o_ref[...] = acc.astype(o_ref.dtype)


# --------------------------------- parameters ---------------------------------

def init_params(key, din_branch, din_trunk, hidden, p, nx):
    """Parameters in the ORIGINAL (PyTorch-like) layout: trunk W2 is (hidden, nx*p)."""
    ks = jax.random.split(key, 8)

    def lin(kw, kb, din, dout):
        scale = 1.0 / jnp.sqrt(jnp.float32(din))
        w = jax.random.uniform(kw, (din, dout), jnp.float32, -scale, scale)
        b = jax.random.uniform(kb, (1, dout), jnp.float32, -scale, scale)
        return w, b

    bw1, bb1 = lin(ks[0], ks[1], din_branch, hidden)
    bw2, bb2 = lin(ks[2], ks[3], hidden, p)
    tw1, tb1 = lin(ks[4], ks[5], din_trunk, hidden)
    tw2, tb2 = lin(ks[6], ks[7], hidden, nx * p)          # p-minor (original) layout
    return {"branch": (bw1, bb1, bw2, bb2), "trunk": (tw1, tb1, tw2, tb2)}


def prepare_pallas_params(params, nx, p):
    """One-time relayout of trunk layer-2 to nx-minor so kernel slices are lane-aligned.

    For production shapes, additionally cast weights to bf16 here (keep f32 biases
    and preferred_element_type=f32 in the kernels) for 2x+ MXU throughput / half the
    weight DMA bytes.  Kept f32 for the demo to hold the 1e-4 tolerance.
    """
    bw1, bb1, bw2, bb2 = params["branch"]
    tw1, tb1, tw2, tb2 = params["trunk"]
    hidden = tw2.shape[0]
    tw2_pnx = tw2.reshape(hidden, nx, p).transpose(0, 2, 1).reshape(hidden, p * nx)
    tb2_pnx = tb2.reshape(1, nx, p).transpose(0, 2, 1).reshape(1, p * nx)
    return {"branch": (bw1, bb1, bw2, bb2), "trunk": (tw1, tb1, tw2_pnx, tb2_pnx)}


# ----------------------------------- forward ----------------------------------

def deeponet_forward(prepared_params, x_branch, x_trunk, *, block_b=128):
    """Mirrors Model.forward of the PyTorch DeepONet (trunk pre-pass + batched kernel)."""
    # x_trunk = x_trunk[0, ...].flatten()  -> a single (1, nx) coordinate row.
    xt = x_trunk[0, ...].reshape(1, -1).astype(jnp.float32)
    nx = xt.shape[1]

    assert x_branch.ndim == 3, "x should have 3 dims (batch, n_space*nvar, n_t)"
    xb = x_branch.reshape(x_branch.shape[0], -1).astype(jnp.float32)
    batch, din_b = xb.shape

    bw1, bb1, bw2, bb2 = prepared_params["branch"]
    tw1, tb1, tw2, tb2 = prepared_params["trunk"]
    hidden = bw1.shape[1]
    p = tw2.shape[1] // nx

    # Layout guard: lane-aligned trunk slices + lane-dense (unmasked) output stores.
    assert nx % 128 == 0, "nx must be a multiple of 128"  # TODO(synk): pad nx for general grids

    # ---- 1. trunk MLP (batch-independent): one tiny grid-free call ----
    ot = pl.pallas_call(
        _trunk_kernel,
        out_shape=jax.ShapeDtypeStruct((1, p * nx), jnp.float32),
        in_specs=[_VMEM_SPEC] * 5,
        out_specs=_VMEM_SPEC,
    )(xt, tw1, tb1, tw2, tb2)

    # ---- 2. branch MLP + contraction: batch-row grid, resident weights ----
    bb = block_b if batch >= block_b else _round_up(batch, 8)
    b_pad = _round_up(batch, bb)
    if b_pad != batch:
        xb = jnp.pad(xb, ((0, b_pad - batch), (0, 0)))

    out = pl.pallas_call(
        _branch_contract_kernel,
        out_shape=jax.ShapeDtypeStruct((b_pad, nx), jnp.float32),
        grid=(b_pad // bb,),
        in_specs=[
            pl.BlockSpec((bb, din_b), lambda i: (i, 0)),        # xb : tiled over batch
            pl.BlockSpec((din_b, hidden), lambda i: (0, 0)),    # resident weights
            pl.BlockSpec((1, hidden), lambda i: (0, 0)),
            pl.BlockSpec((hidden, p), lambda i: (0, 0)),
            pl.BlockSpec((1, p), lambda i: (0, 0)),
            pl.BlockSpec((1, p * nx), lambda i: (0, 0)),        # precomputed trunk
        ],
        out_specs=pl.BlockSpec((bb, nx), lambda i: (i, 0)),
        compiler_params=pltpu.CompilerParams(
            dimension_semantics=("parallel",)),
    )(xb, bw1, bb1, bw2, bb2, ot)

    return out[:batch, None, :]                                  # (B, 1, nx)


def _reference_forward(params, x_branch, x_trunk):
    """Pure-JAX reference with the original PyTorch layout/semantics."""
    xt = x_trunk[0, ...].reshape(-1).astype(jnp.float32)
    nx = xt.shape[0]
    xb = x_branch.reshape(x_branch.shape[0], -1).astype(jnp.float32)

    bw1, bb1, bw2, bb2 = params["branch"]
    tw1, tb1, tw2, tb2 = params["trunk"]

    ob = jnp.maximum(xb @ bw1 + bb1, 0.0) @ bw2 + bb2
    ot = jnp.maximum(xt.reshape(1, nx) @ tw1 + tb1, 0.0) @ tw2 + tb2
    ot = ot.reshape(nx, -1)
    out = jnp.einsum("bi,ni->bn", ob, ot)
    return out[:, None, :]


# ------------------------------------ main -------------------------------------

if __name__ == "__main__":
    # Small, TPU-friendly shapes consistent with the forward:
    #   x_branch: (batch=2, n_space*nvar=4, n_t=8)  -> branch input dim 32
    #   x_trunk : (3, 8, 16); x_trunk[0] flattens to nx = 128 trunk input features
    B, NSV, NT = 2, 4, 8
    TRUNK_LEAD, S0, S1 = 3, 8, 16
    NX = S0 * S1            # 128 (lane-dense output)
    HIDDEN = 128
    P = 8                   # shared latent dim of branch / trunk outputs

    key = jax.random.PRNGKey(0)
    k_xb, k_xt, k_params, k_xb2 = jax.random.split(key, 4)

    x_branch = jax.random.normal(k_xb, (B, NSV, NT), jnp.float32)
    x_trunk = jax.random.normal(k_xt, (TRUNK_LEAD, S0, S1), jnp.float32)

    raw_params = init_params(k_params, din_branch=NSV * NT, din_trunk=NX,
                             hidden=HIDDEN, p=P, nx=NX)
    pallas_params = prepare_pallas_params(raw_params, nx=NX, p=P)

    # --- small-batch check (single grid step) ---
    out = jax.block_until_ready(deeponet_forward(pallas_params, x_branch, x_trunk))
    ref = _reference_forward(raw_params, x_branch, x_trunk)
    assert out.shape == (B, 1, NX), out.shape
    assert jnp.allclose(out, ref, atol=1e-4, rtol=1e-4), "mismatch vs reference (B=2)"

    # --- larger-batch check (multi-step parallel grid + batch padding path) ---
    B2 = 260
    x_branch2 = jax.random.normal(k_xb2, (B2, NSV, NT), jnp.float32)
    out2 = jax.block_until_ready(deeponet_forward(pallas_params, x_branch2, x_trunk))
    ref2 = _reference_forward(raw_params, x_branch2, x_trunk)
    assert out2.shape == (B2, 1, NX), out2.shape
    assert jnp.allclose(out2, ref2, atol=1e-4, rtol=1e-4), "mismatch vs reference (B=260)"

    print("KERNEL_OK")
</pallas_src>

<mosaic_0001>
module attributes {stable_mosaic.version = 11 : i64} {
  func.func @_trunk_kernel(%arg0: memref<1x128xf32, #tpu.memory_space<vmem>>, %arg1: memref<128x128xf32, #tpu.memory_space<vmem>>, %arg2: memref<1x128xf32, #tpu.memory_space<vmem>>, %arg3: memref<128x1024xf32, #tpu.memory_space<vmem>>, %arg4: memref<1x1024xf32, #tpu.memory_space<vmem>>, %arg5: memref<1x1024xf32, #tpu.memory_space<vmem>>) attributes {dimension_semantics = [], scalar_prefetch = 0 : i64, scratch_operands = 0 : i64, tpu.core_type = #tpu.core_type<tc>} {
    %c0 = arith.constant 0 : index
    %c0_0 = arith.constant 0 : index
    %0 = vector.load %arg0[%c0, %c0_0] : memref<1x128xf32, #tpu.memory_space<vmem>>, vector<1x128xf32>
    %c0_1 = arith.constant 0 : index
    %c0_2 = arith.constant 0 : index
    %1 = vector.load %arg1[%c0_1, %c0_2] : memref<128x128xf32, #tpu.memory_space<vmem>>, vector<128x128xf32>
    %cst = arith.constant dense<0.000000e+00> : vector<1x128xf32>
    %2 = tpu.matmul %0, %1, %cst {dimension_numbers = #tpu.dot_dimension_numbers<[1], [0], [0], [1], [0, 0, 1, 1], [], []>} : vector<1x128xf32>, vector<128x128xf32>, vector<1x128xf32> -> vector<1x128xf32>
    %c0_3 = arith.constant 0 : index
    %c0_4 = arith.constant 0 : index
    %3 = vector.load %arg2[%c0_3, %c0_4] : memref<1x128xf32, #tpu.memory_space<vmem>>, vector<1x128xf32>
    %4 = arith.addf %2, %3 : vector<1x128xf32>
    %cst_5 = arith.constant 0.000000e+00 : f32
    %5 = vector.broadcast %cst_5 : f32 to vector<1x128xf32>
    %6 = arith.maximumf %4, %5 : vector<1x128xf32>
    %c0_6 = arith.constant 0 : index
    %c0_7 = arith.constant 0 : index
    %7 = vector.load %arg3[%c0_6, %c0_7] : memref<128x1024xf32, #tpu.memory_space<vmem>>, vector<128x1024xf32>
    %cst_8 = arith.constant dense<0.000000e+00> : vector<1x1024xf32>
    %8 = tpu.matmul %6, %7, %cst_8 {dimension_numbers = #tpu.dot_dimension_numbers<[1], [0], [0], [1], [0, 0, 1, 1], [], []>} : vector<1x128xf32>, vector<128x1024xf32>, vector<1x1024xf32> -> vector<1x1024xf32>
    %c0_9 = arith.constant 0 : index
    %c0_10 = arith.constant 0 : index
    %9 = vector.load %arg4[%c0_9, %c0_10] : memref<1x1024xf32, #tpu.memory_space<vmem>>, vector<1x1024xf32>
    %10 = arith.addf %8, %9 : vector<1x1024xf32>
    %c0_11 = arith.constant 0 : index
    %c0_12 = arith.constant 0 : index
    %11 = vector.load %arg5[%c0_11, %c0_12] : memref<1x1024xf32, #tpu.memory_space<vmem>>, vector<1x1024xf32>
    tpu.vector_store %arg5[%c0_11, %c0_12], %10 {strides = array<i32>} : memref<1x1024xf32, #tpu.memory_space<vmem>>, vector<1x1024xf32>,
    return
  }
}

</mosaic_0001>

<llo_original>
// kernel: tpu_custom_call.1
$region0: #{tpu_custom_call.1}
  #allocation0 [shape = 'u32[]', space=smem, size = 0x4, offset = 0x4, fixed_abs, tag = 'smem constant byte address 0x4 - core index']
  #allocation1 [shape = 'u32[144,128]{1,0:T(1,128)}', space=vmem, size = 0x12000, scoped, tag = 'internal scratch']
  %s0 = inlined_call_operand.hbm [shape: f32[1,128], index: 0, kind: input, shape index: {}]
  %s1 = inlined_call_operand.hbm [shape: f32[128,128], index: 1, kind: input, shape index: {}]
  %s2 = inlined_call_operand.vmem [shape: f32[1,128], index: 2, kind: input, shape index: {}]
  %s3 = inlined_call_operand.hbm [shape: f32[128,1024], index: 3, kind: input, shape index: {}]
  %s4 = inlined_call_operand.vmem [shape: f32[1,1024], index: 4, kind: input, shape index: {}]
  %s5 = inlined_call_operand.hbm [shape: f32[1,1024], index: 5, kind: output, shape index: {}]
  %s6 = sld [smem:[#allocation0]]
  $region42: #{tpu_custom_call.1} parent=0
    _
  %s8 = ssub.s32 1, %s6
  %s9 = scalar_select 0, %s8, %s6
  $region1: #{tpu_custom_call.1} parent=0
    #allocation2 [shape = 'u8[512]{0}', space=vmem, size = 0x400, scoped, tag = 'input window, operand 0, single buffered']
    #allocation3 [shape = 's32[1]{0}', space=sflag, size = 0x4, scoped, tag = 'scoped memory for tpu_custom_call.1']
    #allocation4 [shape = 's32[1]{0}', space=sflag, size = 0x4, scoped, tag = 'scoped memory for tpu_custom_call.1']
    #allocation5 [shape = 'u8[65536]{0}', space=vmem, size = 0x10000, scoped, tag = 'input window, operand 1, single buffered']
    #allocation6 [shape = 's32[1]{0}', space=sflag, size = 0x4, scoped, tag = 'scoped memory for tpu_custom_call.1']
    #allocation7 [shape = 'u8[524288]{0}', space=vmem, size = 0x80000, scoped, tag = 'input window, operand 3, single buffered']
    #allocation8 [shape = 'u8[4096]{0}', space=vmem, size = 0x1000, scoped, tag = 'output window, operand 0, single buffered']
    %10 = vsyncpa [#allocation3], 0
    %11 = vsyncpa [#allocation6], 0
    %12 = vsyncpa [#allocation4], 0
    // Predicated region
    $region2: #{tpu_custom_call.1} parent=1 // pred_check
      _
    $region3: #{tpu_custom_call.1} parent=1 // pred_check_branch
      %14 = sbr.rel (0) target = $region5
    $region4: #{tpu_custom_call.1} parent=1 // pred_region
      %s16 = ssub.s32 16, 16
      %17 = vsyncadd [#allocation3], %s16
      %s19 = sshll.u32 [#allocation2], 4
      %s20 = int_to_ptr.vmem [resolvable:$true] %s19
      %22 = dma.hbm_to_vmem [thread:$0]  %s0, 16, %s20, [#allocation3]
    $region5: #{tpu_custom_call.1} parent=1 // pred_fallthru
      _
    // Predicated region
    $region6: #{tpu_custom_call.1} parent=1 // pred_check
      _
    $region7: #{tpu_custom_call.1} parent=1 // pred_check_branch
      %24 = sbr.rel (0) target = $region9
    $region8: #{tpu_custom_call.1} parent=1 // pred_region
      %s26 = ssub.s32 2048, 2048
      %27 = vsyncadd [#allocation6], %s26
      %s28 = sshll.u32 [#allocation5], 4
      %s29 = int_to_ptr.vmem [resolvable:$true] %s28
      %34 = dma.hbm_to_vmem [thread:$0]  %s1, 2048, %s29, [#allocation6], 128, 128, 8
    $region9: #{tpu_custom_call.1} parent=1 // pred_fallthru
      _
    // Predicated region
    $region10: #{tpu_custom_call.1} parent=1 // pred_check
      _
    $region11: #{tpu_custom_call.1} parent=1 // pred_check_branch
      %36 = sbr.rel (0) target = $region13
    $region12: #{tpu_custom_call.1} parent=1 // pred_region
      _
    $region13: #{tpu_custom_call.1} parent=1 // pred_fallthru
      _
    // Predicated region
    $region14: #{tpu_custom_call.1} parent=1 // pred_check
      _
    $region15: #{tpu_custom_call.1} parent=1 // pred_check_branch
      %38 = sbr.rel (0) target = $region17
    $region16: #{tpu_custom_call.1} parent=1 // pred_region
      %s40 = ssub.s32 16384, 16384
      %41 = vsyncadd [#allocation6], %s40
      %s42 = sshll.u32 [#allocation7], 4
      %s43 = int_to_ptr.vmem [resolvable:$true] %s42
      %48 = dma.hbm_to_vmem [thread:$0]  %s3, 16384, %s43, [#allocation6], 1024, 1024, 64
    $region17: #{tpu_custom_call.1} parent=1 // pred_fallthru
      _
    // Predicated region
    $region18: #{tpu_custom_call.1} parent=1 // pred_check
      _
    $region19: #{tpu_custom_call.1} parent=1 // pred_check_branch
      %50 = sbr.rel (0) target = $region21
    $region20: #{tpu_custom_call.1} parent=1 // pred_region
      _
    $region21: #{tpu_custom_call.1} parent=1 // pred_fallthru
      _
    // Predicated region
    $region22: #{tpu_custom_call.1} parent=1 // pred_check
      _
    $region23: #{tpu_custom_call.1} parent=1 // pred_check_branch
      %52 = sbr.rel (0) target = $region25
    $region24: #{tpu_custom_call.1} parent=1 // pred_region
      %53 = dma.done [#allocation3], 16
    $region25: #{tpu_custom_call.1} parent=1 // pred_fallthru
      _
    // Predicated region
    $region26: #{tpu_custom_call.1} parent=1 // pred_check
      _
    $region27: #{tpu_custom_call.1} parent=1 // pred_check_branch
      %55 = sbr.rel (0) target = $region29
    $region28: #{tpu_custom_call.1} parent=1 // pred_region
      %56 = dma.done [#allocation6], 2048
    $region29: #{tpu_custom_call.1} parent=1 // pred_fallthru
      _
    // Predicated region
    $region30: #{tpu_custom_call.1} parent=1 // pred_check
      _
    $region31: #{tpu_custom_call.1} parent=1 // pred_check_branch
      %58 = sbr.rel (0) target = $region33
    $region32: #{tpu_custom_call.1} parent=1 // pred_region
      %59 = dma.done [#allocation6], 16384
    $region33: #{tpu_custom_call.1} parent=1 // pred_fallthru
      _
    %v60 = vld [vmem:[#allocation2] sm:$0x1]
    %v61 = vld [vmem:[#allocation5] sm:$0xff]
    %v62 = vld [vmem:[#allocation5 + $0x8] sm:$0xff]
    %v63 = vld [vmem:[#allocation5 + $0x10] sm:$0xff]
    %v64 = vld [vmem:[#allocation5 + $0x18] sm:$0xff]
    %v65 = vld [vmem:[#allocation5 + $0x20] sm:$0xff]
    %v66 = vld [vmem:[#allocation5 + $0x28] sm:$0xff]
    %v67 = vld [vmem:[#allocation5 + $0x30] sm:$0xff]
    %v68 = vld [vmem:[#allocation5 + $0x38] sm:$0xff]
    %v69 = vld [vmem:[#allocation5 + $0x40] sm:$0xff]
    %v70 = vld [vmem:[#allocation5 + $0x48] sm:$0xff]
    %v71 = vld [vmem:[#allocation5 + $0x50] sm:$0xff]
    %v72 = vld [vmem:[#allocation5 + $0x58] sm:$0xff]
    %v73 = vld [vmem:[#allocation5 + $0x60] sm:$0xff]
    %v74 = vld [vmem:[#allocation5 + $0x68] sm:$0xff]
    %v75 = vld [vmem:[#allocation5 + $0x70] sm:$0xff]
    %v76 = vld [vmem:[#allocation5 + $0x78] sm:$0xff]
    %v77 = vld [vmem:[%s2] sm:$0x1]
    %78 = vmatprep.subr.mxu0 0.0
    %79 = vmatpush1.msra.mxu0 %v61
    %80 = vmatprep.subr.mxu0 0.0
    %81 = vmatpush1.msra.mxu0 %v62
    %82 = vmatprep.subr.mxu0 0.0
    %83 = vmatpush1.msra.mxu0 %v63
    %84 = vmatprep.subr.mxu0 0.0
    %85 = vmatpush1.msra.mxu0 %v64
    %86 = vmatprep.subr.mxu0 0.0
    %87 = vmatpush1.msra.mxu0 %v65
    %88 = vmatprep.subr.mxu0 0.0
    %89 = vmatpush1.msra.mxu0 %v66
    %90 = vmatprep.subr.mxu0 0.0
    %91 = vmatpush1.msra.mxu0 %v67
    %92 = vmatprep.subr.mxu0 0.0
    %93 = vmatpush1.msra.mxu0 %v68
    %94 = vmatprep.subr.mxu0 0.0
    %95 = vmatpush1.msra.mxu0 %v69
    %96 = vmatprep.subr.mxu0 0.0
    %97 = vmatpush1.msra.mxu0 %v70
    %98 = vmatprep.subr.mxu0 0.0
    %99 = vmatpush1.msra.mxu0 %v71
    %100 = vmatprep.subr.mxu0 0.0
    %101 = vmatpush1.msra.mxu0 %v72
    %102 = vmatprep.subr.mxu0 0.0
    %103 = vmatpush1.msra.mxu0 %v73
    %104 = vmatprep.subr.mxu0 0.0
    %105 = vmatpush1.msra.mxu0 %v74
    %106 = vmatprep.subr.mxu0 0.0
    %107 = vmatpush1.msra.mxu0 %v75
    %108 = vmatprep.subr.mxu0 0.0
    %109 = vmatpush1.msra.mxu0 %v76
    %110 = vmatprep.subr.mxu0 0.0
    %111 = vmatpush1.msra.mxu0 0.0
    %112 = vmatprep.subr.mxu0 0.0
    %113 = vmatpush1.msra.mxu0 0.0
    %114 = vmatprep.subr.mxu0 0.0
    %115 = vmatpush1.msra.mxu0 0.0
    %116 = vmatprep.subr.mxu0 0.0
    %117 = vmatpush1.msra.mxu0 0.0
    %118 = vmatprep.subr.mxu0 0.0
    %119 = vmatpush1.msra.mxu0 0.0
    %120 = vmatprep.subr.mxu0 0.0
    %121 = vmatpush1.msra.mxu0 0.0
    %122 = vmatprep.subr.mxu0 0.0
    %123 = vmatpush1.msra.mxu0 0.0
    %124 = vmatprep.subr.mxu0 0.0
    %125 = vmatpush1.msra.mxu0 0.0
    %126 = vmatprep.subr.mxu0 0.0
    %127 = vmatpush1.msra.mxu0 0.0
    %128 = vmatprep.subr.mxu0 0.0
    %129 = vmatpush1.msra.mxu0 0.0
    %130 = vmatprep.subr.mxu0 0.0
    %131 = vmatpush1.msra.mxu0 0.0
    %132 = vmatprep.subr.mxu0 0.0
    %133 = vmatpush1.msra.mxu0 0.0
    %134 = vmatprep.subr.mxu0 0.0
    %135 = vmatpush1.msra.mxu0 0.0
    %136 = vmatprep.subr.mxu0 0.0
    %137 = vmatpush1.msra.mxu0 0.0
    %138 = vmatprep.subr.mxu0 0.0
    %139 = vmatpush1.msra.mxu0 0.0
    %140 = vmatprep.subr.mxu0 0.0
    %141 = vmatpush1.msra.mxu0 0.0
    %142 = vmatprep.mubr.f32.mxu0 0.0
    %143 = vmatmul.mubr.f32.gmra.mrb[0].mxu0 %v60
    %v144 = vpop.f32.mrb[0].mxu0
    %v145 = vadd.f32 %v77, %v144
    %v146 = vpop.f32.mrb[0].mxu0
    %147 = vdwg.mxu0
    %v148 = vmax.f32 %v145, 0.0
    %v149 = vld [vmem:[#allocation7] sm:$0xff]
    %v150 = vld [vmem:[#allocation7 + $0x8] sm:$0xff]
    %v151 = vld [vmem:[#allocation7 + $0x10] sm:$0xff]
    %v152 = vld [vmem:[#allocation7 + $0x18] sm:$0xff]
    %v153 = vld [vmem:[#allocation7 + $0x20] sm:$0xff]
    %v154 = vld [vmem:[#allocation7 + $0x28] sm:$0xff]
    %v155 = vld [vmem:[#allocation7 + $0x30] sm:$0xff]
    %v156 = vld [vmem:[#allocation7 + $0x38] sm:$0xff]
    %v157 = vld [vmem:[#allocation7 + $0x40] sm:$0xff]
    %v158 = vld [vmem:[#allocation7 + $0x48] sm:$0xff]
    %v159 = vld [vmem:[#allocation7 + $0x50] sm:$0xff]
    %v160 = vld [vmem:[#allocation7 + $0x58] sm:$0xff]
    %v161 = vld [vmem:[#allocation7 + $0x60] sm:$0xff]
    %v162 = vld [vmem:[#allocation7 + $0x68] sm:$0xff]
    %v163 = vld [vmem:[#allocation7 + $0x70] sm:$0xff]
    %v164 = vld [vmem:[#allocation7 + $0x78] sm:$0xff]
    %v165 = vld [vmem:[#allocation7 + $0x80] sm:$0xff]
    %v166 = vld [vmem:[#allocation7 + $0x88] sm:$0xff]
    %v167 = vld [vmem:[#allocation7 + $0x90] sm:$0xff]
    %v168 = vld [vmem:[#allocation7 + $0x98] sm:$0xff]
    %v169 = vld [vmem:[#allocation7 + $0xa0] sm:$0xff]
    %v170 = vld [vmem:[#allocation7 + $0xa8] sm:$0xff]
    %v171 = vld [vmem:[#allocation7 + $0xb0] sm:$0xff]
    %v172 = vld [vmem:[#allocation7 + $0xb8] sm:$0xff]
    %v173 = vld [vmem:[#allocation7 + $0xc0] sm:$0xff]
    %v174 = vld [vmem:[#allocation7 + $0xc8] sm:$0xff]
    %v175 = vld [vmem:[#allocation7 + $0xd0] sm:$0xff]
    %v176 = vld [vmem:[#allocation7 + $0xd8] sm:$0xff]
    %v177 = vld [vmem:[#allocation7 + $0xe0] sm:$0xff]
    %v178 = vld [vmem:[#allocation7 + $0xe8] sm:$0xff]
    %v179 = vld [vmem:[#allocation7 + $0xf0] sm:$0xff]
    %v180 = vld [vmem:[#allocation7 + $0xf8] sm:$0xff]
    %v181 = vld [vmem:[#allocation7 + $0x100] sm:$0xff]
    %v182 = vld [vmem:[#allocation7 + $0x108] sm:$0xff]
    %v183 = vld [vmem:[#allocation7 + $0x110] sm:$0xff]
    %v184 = vld [vmem:[#allocation7 + $0x118] sm:$0xff]
    %v185 = vld [vmem:[#allocation7 + $0x120] sm:$0xff]
    %v186 = vld [vmem:[#allocation7 + $0x128] sm:$0xff]
    %v187 = vld [vmem:[#allocation7 + $0x130] sm:$0xff]
    %v188 = vld [vmem:[#allocation7 + $0x138] sm:$0xff]
    %v189 = vld [vmem:[#allocation7 + $0x140] sm:$0xff]
    %v190 = vld [vmem:[#allocation7 + $0x148] sm:$0xff]
    %v191 = vld [vmem:[#allocation7 + $0x150] sm:$0xff]
    %v192 = vld [vmem:[#allocation7 + $0x158] sm:$0xff]
    %v193 = vld [vmem:[#allocation7 + $0x160] sm:$0xff]
    %v194 = vld [vmem:[#allocation7 + $0x168] sm:$0xff]
    %v195 = vld [vmem:[#allocation7 + $0x170] sm:$0xff]
    %v196 = vld [vmem:[#allocation7 + $0x178] sm:$0xff]
    %v197 = vld [vmem:[#allocation7 + $0x180] sm:$0xff]
    %v198 = vld [vmem:[#allocation7 + $0x188] sm:$0xff]
    %v199 = vld [vmem:[#allocation7 + $0x190] sm:$0xff]
    %v200 = vld [vmem:[#allocation7 + $0x198] sm:$0xff]
    %v201 = vld [vmem:[#allocation7 + $0x1a0] sm:$0xff]
    %v202 = vld [vmem:[#allocation7 + $0x1a8] sm:$0xff]
    %v203 = vld [vmem:[#allocation7 + $0x1b0] sm:$0xff]
    %v204 = vld [vmem:[#allocation7 + $0x1b8] sm:$0xff]
    %v205 = vld [vmem:[#allocation7 + $0x1c0] sm:$0xff]
    %v206 = vld [vmem:[#allocation7 + $0x1c8] sm:$0xff]
    %v207 = vld [vmem:[#allocation7 + $0x1d0] sm:$0xff]
    %v208 = vld [vmem:[#allocation7 + $0x1d8] sm:$0xff]
    %v209 = vld [vmem:[#allocation7 + $0x1e0] sm:$0xff]
    %v210 = vld [vmem:[#allocation7 + $0x1e8] sm:$0xff]
    %v211 = vld [vmem:[#allocation7 + $0x1f0] sm:$0xff]
    %v212 = vld [vmem:[#allocation7 + $0x1f8] sm:$0xff]
    %v213 = vld [vmem:[#allocation7 + $0x200] sm:$0xff]
    %v214 = vld [vmem:[#allocation7 + $0x208] sm:$0xff]
    %v215 = vld [vmem:[#allocation7 + $0x210] sm:$0xff]
    %v216 = vld [vmem:[#allocation7 + $0x218] sm:$0xff]
    %v217 = vld [vmem:[#allocation7 + $0x220] sm:$0xff]
    %v218 = vld [vmem:[#allocation7 + $0x228] sm:$0xff]
    %v219 = vld [vmem:[#allocation7 + $0x230] sm:$0xff]
    %v220 = vld [vmem:[#allocation7 + $0x238] sm:$0xff]
    %v221 = vld [vmem:[#allocation7 + $0x240] sm:$0xff]
    %v222 = vld [vmem:[#allocation7 + $0x248] sm:$0xff]
    %v223 = vld [vmem:[#allocation7 + $0x250] sm:$0xff]
    %v224 = vld [vmem:[#allocation7 + $0x258] sm:$0xff]
    %v225 = vld [vmem:[#allocation7 + $0x260] sm:$0xff]
    %v226 = vld [vmem:[#allocation7 + $0x268] sm:$0xff]
    %v227 = vld [vmem:[#allocation7 + $0x270] sm:$0xff]
    %v228 = vld [vmem:[#allocation7 + $0x278] sm:$0xff]
    %v229 = vld [vmem:[#allocation7 + $0x280] sm:$0xff]
    %v230 = vld [vmem:[#allocation7 + $0x288] sm:$0xff]
    %v231 = vld [vmem:[#allocation7 + $0x290] sm:$0xff]
    %v232 = vld [vmem:[#allocation7 + $0x298] sm:$0xff]
    %v233 = vld [vmem:[#allocation7 + $0x2a0] sm:$0xff]
    %v234 = vld [vmem:[#allocation7 + $0x2a8] sm:$0xff]
    %v235 = vld [vmem:[#allocation7 + $0x2b0] sm:$0xff]
    %v236 = vld [vmem:[#allocation7 + $0x2b8] sm:$0xff]
    %v237 = vld [vmem:[#allocation7 + $0x2c0] sm:$0xff]
    %v238 = vld [vmem:[#allocation7 + $0x2c8] sm:$0xff]
    %v239 = vld [vmem:[#allocation7 + $0x2d0] sm:$0xff]
    %v240 = vld [vmem:[#allocation7 + $0x2d8] sm:$0xff]
    %v241 = vld [vmem:[#allocation7 + $0x2e0] sm:$0xff]
    %v242 = vld [vmem:[#allocation7 + $0x2e8] sm:$0xff]
    %v243 = vld [vmem:[#allocation7 + $0x2f0] sm:$0xff]
    %v244 = vld [vmem:[#allocation7 + $0x2f8] sm:$0xff]
    %v245 = vld [vmem:[#allocation7 + $0x300] sm:$0xff]
    %v246 = vld [vmem:[#allocation7 + $0x308] sm:$0xff]
    %v247 = vld [vmem:[#allocation7 + $0x310] sm:$0xff]
    %v248 = vld [vmem:[#allocation7 + $0x318] sm:$0xff]
    %v249 = vld [vmem:[#allocation7 + $0x320] sm:$0xff]
    %v250 = vld [vmem:[#allocation7 + $0x328] sm:$0xff]
    %v251 = vld [vmem:[#allocation7 + $0x330] sm:$0xff]
    %v252 = vld [vmem:[#allocation7 + $0x338] sm:$0xff]
    %v253 = vld [vmem:[#allocation7 + $0x340] sm:$0xff]
    %v254 = vld [vmem:[#allocation7 + $0x348] sm:$0xff]
    %v255 = vld [vmem:[#allocation7 + $0x350] sm:$0xff]
    %v256 = vld [vmem:[#allocation7 + $0x358] sm:$0xff]
    %v257 = vld [vmem:[#allocation7 + $0x360] sm:$0xff]
    %v258 = vld [vmem:[#allocation7 + $0x368] sm:$0xff]
    %v259 = vld [vmem:[#allocation7 + $0x370] sm:$0xff]
    %v260 = vld [vmem:[#allocation7 + $0x378] sm:$0xff]
    %v261 = vld [vmem:[#allocation7 + $0x380] sm:$0xff]
    %v262 = vld [vmem:[#allocation7 + $0x388] sm:$0xff]
    %v263 = vld [vmem:[#allocation7 + $0x390] sm:$0xff]
    %v264 = vld [vmem:[#allocation7 + $0x398] sm:$0xff]
    %v265 = vld [vmem:[#allocation7 + $0x3a0] sm:$0xff]
    %v266 = vld [vmem:[#allocation7 + $0x3a8] sm:$0xff]
    %v267 = vld [vmem:[#allocation7 + $0x3b0] sm:$0xff]
    %v268 = vld [vmem:[#allocation7 + $0x3b8] sm:$0xff]
    %v269 = vld [vmem:[#allocation7 + $0x3c0] sm:$0xff]
    %v270 = vld [vmem:[#allocation7 + $0x3c8] sm:$0xff]
    %v271 = vld [vmem:[#allocation7 + $0x3d0] sm:$0xff]
    %v272 = vld [vmem:[#allocation7 + $0x3d8] sm:$0xff]
    %v273 = vld [vmem:[#allocation7 + $0x3e0] sm:$0xff]
    %v274 = vld [vmem:[#allocation7 + $0x3e8] sm:$0xff]
    %v275 = vld [vmem:[#allocation7 + $0x3f0] sm:$0xff]
    %v276 = vld [vmem:[#allocation7 + $0x3f8] sm:$0xff]
    %v277 = vld [vmem:[%s4] sm:$0xff]
    %v279 = vlaneseq
    %v280 = vshrl.u32 %v279, 7
    %v281 = vsub.s32 0, %v280
    %v282 = vrot.slane %v277, %v281
    %v283 = vlaneseq
    %v284 = vshrl.u32 %v283, 7
    %v285 = vsub.s32 1, %v284
    %v286 = vrot.slane %v277, %v285
    %v287 = vlaneseq
    %v288 = vshrl.u32 %v287, 7
    %v289 = vsub.s32 2, %v288
    %v290 = vrot.slane %v277, %v289
    %v291 = vlaneseq
    %v292 = vshrl.u32 %v291, 7
    %v293 = vsub.s32 3, %v292
    %v294 = vrot.slane %v277, %v293
    %v295 = vlaneseq
    %v296 = vshrl.u32 %v295, 7
    %v297 = vsub.s32 4, %v296
    %v298 = vrot.slane %v277, %v297
    %v299 = vlaneseq
    %v300 = vshrl.u32 %v299, 7
    %v301 = vsub.s32 5, %v300
    %v302 = vrot.slane %v277, %v301
    %v303 = vlaneseq
    %v304 = vshrl.u32 %v303, 7
    %v305 = vsub.s32 6, %v304
    %v306 = vrot.slane %v277, %v305
    %v307 = vlaneseq
    %v308 = vshrl.u32 %v307, 7
    %v309 = vsub.s32 7, %v308
    %v310 = vrot.slane %v277, %v309
    %319 = vmatprep.subr.mxu0 %v150
    %320 = vmatpush1.msra.mxu0 %v149
    %321 = vmatprep.subr.mxu0 %v158
    %322 = vmatpush1.msra.mxu0 %v157
    %323 = vmatprep.subr.mxu0 %v166
    %324 = vmatpush1.msra.mxu0 %v165
    %325 = vmatprep.subr.mxu0 %v174
    %326 = vmatpush1.msra.mxu0 %v173
    %327 = vmatprep.subr.mxu0 %v182
    %328 = vmatpush1.msra.mxu0 %v181
    %329 = vmatprep.subr.mxu0 %v190
    %330 = vmatpush1.msra.mxu0 %v189
    %331 = vmatprep.subr.mxu0 %v198
    %332 = vmatpush1.msra.mxu0 %v197
    %333 = vmatprep.subr.mxu0 %v206
    %334 = vmatpush1.msra.mxu0 %v205
    %335 = vmatprep.subr.mxu0 %v214
    %336 = vmatpush1.msra.mxu0 %v213
    %337 = vmatprep.subr.mxu0 %v222
    %338 = vmatpush1.msra.mxu0 %v221
    %339 = vmatprep.subr.mxu0 %v230
    %340 = vmatpush1.msra.mxu0 %v229
    %341 = vmatprep.subr.mxu0 %v238
    %342 = vmatpush1.msra.mxu0 %v237
    %343 = vmatprep.subr.mxu0 %v246
    %344 = vmatpush1.msra.mxu0 %v245
    %345 = vmatprep.subr.mxu0 %v254
    %346 = vmatpush1.msra.mxu0 %v253
    %347 = vmatprep.subr.mxu0 %v262
    %348 = vmatpush1.msra.mxu0 %v261
    %349 = vmatprep.subr.mxu0 %v270
    %350 = vmatpush1.msra.mxu0 %v269
    %351 = vmatprep.subr.mxu0 0.0
    %352 = vmatpush1.msra.mxu0 0.0
    %353 = vmatprep.subr.mxu0 0.0
    %354 = vmatpush1.msra.mxu0 0.0
    %355 = vmatprep.subr.mxu0 0.0
    %356 = vmatpush1.msra.mxu0 0.0
    %357 = vmatprep.subr.mxu0 0.0
    %358 = vmatpush1.msra.mxu0 0.0
    %359 = vmatprep.subr.mxu0 0.0
    %360 = vmatpush1.msra.mxu0 0.0
    %361 = vmatprep.subr.mxu0 0.0
    %362 = vmatpush1.msra.mxu0 0.0
    %363 = vmatprep.subr.mxu0 0.0
    %364 = vmatpush1.msra.mxu0 0.0
    %365 = vmatprep.subr.mxu0 0.0
    %366 = vmatpush1.msra.mxu0 0.0
    %367 = vmatprep.subr.mxu0 0.0
    %368 = vmatpush1.msra.mxu0 0.0
    %369 = vmatprep.subr.mxu0 0.0
    %370 = vmatpush1.msra.mxu0 0.0
    %371 = vmatprep.subr.mxu0 0.0
    %372 = vmatpush1.msra.mxu0 0.0
    %373 = vmatprep.subr.mxu0 0.0
    %374 = vmatpush1.msra.mxu0 0.0
    %375 = vmatprep.subr.mxu0 0.0
    %376 = vmatpush1.msra.mxu0 0.0
    %377 = vmatprep.subr.mxu0 0.0
    %378 = vmatpush1.msra.mxu0 0.0
    %379 = vmatprep.subr.mxu0 0.0
    %380 = vmatpush1.msra.mxu0 0.0
    %381 = vmatprep.subr.mxu0 0.0
    %382 = vmatpush1.msra.mxu0 0.0
    %383 = vmatprep.mubr.f32.mxu0 0.0
    %384 = vmatmul.mubr.f32.gmra.mrb[0].mxu0 %v148
    %v385 = vpop.f32.mrb[0].mxu0
    %v386 = vadd.f32 %v282, %v385
    %v387 = vpop.f32.mrb[0].mxu0
    %v388 = vadd.f32 %v286, %v387
    %389 = vdwg.mxu0
    %390 = vmatprep.subr.mxu0 %v152
    %391 = vmatpush1.msra.mxu0 %v151
    %392 = vmatprep.subr.mxu0 %v160
    %393 = vmatpush1.msra.mxu0 %v159
    %394 = vmatprep.subr.mxu0 %v168
    %395 = vmatpush1.msra.mxu0 %v167
    %396 = vmatprep.subr.mxu0 %v176
    %397 = vmatpush1.msra.mxu0 %v175
    %398 = vmatprep.subr.mxu0 %v184
    %399 = vmatpush1.msra.mxu0 %v183
    %400 = vmatprep.subr.mxu0 %v192
    %401 = vmatpush1.msra.mxu0 %v191
    %402 = vmatprep.subr.mxu0 %v200
    %403 = vmatpush1.msra.mxu0 %v199
    %404 = vmatprep.subr.mxu0 %v208
    %405 = vmatpush1.msra.mxu0 %v207
    %406 = vmatprep.subr.mxu0 %v216
    %407 = vmatpush1.msra.mxu0 %v215
    %408 = vmatprep.subr.mxu0 %v224
    %409 = vmatpush1.msra.mxu0 %v223
    %410 = vmatprep.subr.mxu0 %v232
    %411 = vmatpush1.msra.mxu0 %v231
    %412 = vmatprep.subr.mxu0 %v240
    %413 = vmatpush1.msra.mxu0 %v239
    %414 = vmatprep.subr.mxu0 %v248
    %415 = vmatpush1.msra.mxu0 %v247
    %416 = vmatprep.subr.mxu0 %v256
    %417 = vmatpush1.msra.mxu0 %v255
    %418 = vmatprep.subr.mxu0 %v264
    %419 = vmatpush1.msra.mxu0 %v263
    %420 = vmatprep.subr.mxu0 %v272
    %421 = vmatpush1.msra.mxu0 %v271
    %422 = vmatprep.subr.mxu0 0.0
    %423 = vmatpush1.msra.mxu0 0.0
    %424 = vmatprep.subr.mxu0 0.0
    %425 = vmatpush1.msra.mxu0 0.0
    %426 = vmatprep.subr.mxu0 0.0
    %427 = vmatpush1.msra.mxu0 0.0
    %428 = vmatprep.subr.mxu0 0.0
    %429 = vmatpush1.msra.mxu0 0.0
    %430 = vmatprep.subr.mxu0 0.0
    %431 = vmatpush1.msra.mxu0 0.0
    %432 = vmatprep.subr.mxu0 0.0
    %433 = vmatpush1.msra.mxu0 0.0
    %434 = vmatprep.subr.mxu0 0.0
    %435 = vmatpush1.msra.mxu0 0.0
    %436 = vmatprep.subr.mxu0 0.0
    %437 = vmatpush1.msra.mxu0 0.0
    %438 = vmatprep.subr.mxu0 0.0
    %439 = vmatpush1.msra.mxu0 0.0
    %440 = vmatprep.subr.mxu0 0.0
    %441 = vmatpush1.msra.mxu0 0.0
    %442 = vmatprep.subr.mxu0 0.0
    %443 = vmatpush1.msra.mxu0 0.0
    %444 = vmatprep.subr.mxu0 0.0
    %445 = vmatpush1.msra.mxu0 0.0
    %446 = vmatprep.subr.mxu0 0.0
    %447 = vmatpush1.msra.mxu0 0.0
    %448 = vmatprep.subr.mxu0 0.0
    %449 = vmatpush1.msra.mxu0 0.0
    %450 = vmatprep.subr.mxu0 0.0
    %451 = vmatpush1.msra.mxu0 0.0
    %452 = vmatprep.subr.mxu0 0.0
    %453 = vmatpush1.msra.mxu0 0.0
    %454 = vmatprep.mubr.f32.mxu0 0.0
    %455 = vmatmul.mubr.f32.gmra.mrb[0].mxu0 %v148
    %v456 = vpop.f32.mrb[0].mxu0
    %v457 = vadd.f32 %v290, %v456
    %v458 = vpop.f32.mrb[0].mxu0
    %v459 = vadd.f32 %v294, %v458
    %460 = vdwg.mxu0
    %461 = vmatprep.subr.mxu0 %v154
    %462 = vmatpush1.msra.mxu0 %v153
    %463 = vmatprep.subr.mxu0 %v162
    %464 = vmatpush1.msra.mxu0 %v161
    %465 = vmatprep.subr.mxu0 %v170
    %466 = vmatpush1.msra.mxu0 %v169
    %467 = vmatprep.subr.mxu0 %v178
    %468 = vmatpush1.msra.mxu0 %v177
    %469 = vmatprep.subr.mxu0 %v186
    %470 = vmatpush1.msra.mxu0 %v185
    %471 = vmatprep.subr.mxu0 %v194
    %472 = vmatpush1.msra.mxu0 %v193
    %473 = vmatprep.subr.mxu0 %v202
    %474 = vmatpush1.msra.mxu0 %v201
    %475 = vmatprep.subr.mxu0 %v210
    %476 = vmatpush1.msra.mxu0 %v209
    %477 = vmatprep.subr.mxu0 %v218
    %478 = vmatpush1.msra.mxu0 %v217
    %479 = vmatprep.subr.mxu0 %v226
    %480 = vmatpush1.msra.mxu0 %v225
    %481 = vmatprep.subr.mxu0 %v234
    %482 = vmatpush1.msra.mxu0 %v233
    %483 = vmatprep.subr.mxu0 %v242
    %484 = vmatpush1.msra.mxu0 %v241
    %485 = vmatprep.subr.mxu0 %v250
    %486 = vmatpush1.msra.mxu0 %v249
    %487 = vmatprep.subr.mxu0 %v258
    %488 = vmatpush1.msra.mxu0 %v257
    %489 = vmatprep.subr.mxu0 %v266
    %490 = vmatpush1.msra.mxu0 %v265
    %491 = vmatprep.subr.mxu0 %v274
    %492 = vmatpush1.msra.mxu0 %v273
    %493 = vmatprep.subr.mxu0 0.0
    %494 = vmatpush1.msra.mxu0 0.0
    %495 = vmatprep.subr.mxu0 0.0
    %496 = vmatpush1.msra.mxu0 0.0
    %497 = vmatprep.subr.mxu0 0.0
    %498 = vmatpush1.msra.mxu0 0.0
    %499 = vmatprep.subr.mxu0 0.0
    %500 = vmatpush1.msra.mxu0 0.0
    %501 = vmatprep.subr.mxu0 0.0
    %502 = vmatpush1.msra.mxu0 0.0
    %503 = vmatprep.subr.mxu0 0.0
    %504 = vmatpush1.msra.mxu0 0.0
    %505 = vmatprep.subr.mxu0 0.0
    %506 = vmatpush1.msra.mxu0 0.0
    %507 = vmatprep.subr.mxu0 0.0
    %508 = vmatpush1.msra.mxu0 0.0
    %509 = vmatprep.subr.mxu0 0.0
    %510 = vmatpush1.msra.mxu0 0.0
    %511 = vmatprep.subr.mxu0 0.0
    %512 = vmatpush1.msra.mxu0 0.0
    %513 = vmatprep.subr.mxu0 0.0
    %514 = vmatpush1.msra.mxu0 0.0
    %515 = vmatprep.subr.mxu0 0.0
    %516 = vmatpush1.msra.mxu0 0.0
    %517 = vmatprep.subr.mxu0 0.0
    %518 = vmatpush1.msra.mxu0 0.0
    %519 = vmatprep.subr.mxu0 0.0
    %520 = vmatpush1.msra.mxu0 0.0
    %521 = vmatprep.subr.mxu0 0.0
    %522 = vmatpush1.msra.mxu0 0.0
    %523 = vmatprep.subr.mxu0 0.0
    %524 = vmatpush1.msra.mxu0 0.0
    %525 = vmatprep.mubr.f32.mxu0 0.0
    %526 = vmatmul.mubr.f32.gmra.mrb[0].mxu0 %v148
    %v527 = vpop.f32.mrb[0].mxu0
    %v528 = vadd.f32 %v298, %v527
    %v529 = vpop.f32.mrb[0].mxu0
    %v530 = vadd.f32 %v302, %v529
    %531 = vdwg.mxu0
    %532 = vmatprep.subr.mxu0 %v156
    %533 = vmatpush1.msra.mxu0 %v155
    %534 = vmatprep.subr.mxu0 %v164
    %535 = vmatpush1.msra.mxu0 %v163
    %536 = vmatprep.subr.mxu0 %v172
    %537 = vmatpush1.msra.mxu0 %v171
    %538 = vmatprep.subr.mxu0 %v180
    %539 = vmatpush1.msra.mxu0 %v179
    %540 = vmatprep.subr.mxu0 %v188
    %541 = vmatpush1.msra.mxu0 %v187
    %542 = vmatprep.subr.mxu0 %v196
    %543 = vmatpush1.msra.mxu0 %v195
    %544 = vmatprep.subr.mxu0 %v204
    %545 = vmatpush1.msra.mxu0 %v203
    %546 = vmatprep.subr.mxu0 %v212
    %547 = vmatpush1.msra.mxu0 %v211
    %548 = vmatprep.subr.mxu0 %v220
    %549 = vmatpush1.msra.mxu0 %v219
    %550 = vmatprep.subr.mxu0 %v228
    %551 = vmatpush1.msra.mxu0 %v227
    %552 = vmatprep.subr.mxu0 %v236
    %553 = vmatpush1.msra.mxu0 %v235
    %554 = vmatprep.subr.mxu0 %v244
    %555 = vmatpush1.msra.mxu0 %v243
    %556 = vmatprep.subr.mxu0 %v252
    %557 = vmatpush1.msra.mxu0 %v251
    %558 = vmatprep.subr.mxu0 %v260
    %559 = vmatpush1.msra.mxu0 %v259
    %560 = vmatprep.subr.mxu0 %v268
    %561 = vmatpush1.msra.mxu0 %v267
    %562 = vmatprep.subr.mxu0 %v276
    %563 = vmatpush1.msra.mxu0 %v275
    %564 = vmatprep.subr.mxu0 0.0
    %565 = vmatpush1.msra.mxu0 0.0
    %566 = vmatprep.subr.mxu0 0.0
    %567 = vmatpush1.msra.mxu0 0.0
    %568 = vmatprep.subr.mxu0 0.0
    %569 = vmatpush1.msra.mxu0 0.0
    %570 = vmatprep.subr.mxu0 0.0
    %571 = vmatpush1.msra.mxu0 0.0
    %572 = vmatprep.subr.mxu0 0.0
    %573 = vmatpush1.msra.mxu0 0.0
    %574 = vmatprep.subr.mxu0 0.0
    %575 = vmatpush1.msra.mxu0 0.0
    %576 = vmatprep.subr.mxu0 0.0
    %577 = vmatpush1.msra.mxu0 0.0
    %578 = vmatprep.subr.mxu0 0.0
    %579 = vmatpush1.msra.mxu0 0.0
    %580 = vmatprep.subr.mxu0 0.0
    %581 = vmatpush1.msra.mxu0 0.0
    %582 = vmatprep.subr.mxu0 0.0
    %583 = vmatpush1.msra.mxu0 0.0
    %584 = vmatprep.subr.mxu0 0.0
    %585 = vmatpush1.msra.mxu0 0.0
    %586 = vmatprep.subr.mxu0 0.0
    %587 = vmatpush1.msra.mxu0 0.0
    %588 = vmatprep.subr.mxu0 0.0
    %589 = vmatpush1.msra.mxu0 0.0
    %590 = vmatprep.subr.mxu0 0.0
    %591 = vmatpush1.msra.mxu0 0.0
    %592 = vmatprep.subr.mxu0 0.0
    %593 = vmatpush1.msra.mxu0 0.0
    %594 = vmatprep.subr.mxu0 0.0
    %595 = vmatpush1.msra.mxu0 0.0
    %596 = vmatprep.mubr.f32.mxu0 0.0
    %597 = vmatmul.mubr.f32.gmra.mrb[0].mxu0 %v148
    %v598 = vpop.f32.mrb[0].mxu0
    %v599 = vadd.f32 %v306, %v598
    %v600 = vpop.f32.mrb[0].mxu0
    %v601 = vadd.f32 %v310, %v600
    %602 = vdwg.mxu0
    %v611 = vcombine.low %v386, %v388
    %v612 = vcombine.low %v457, %v459
    %v613 = vcombine.low %v528, %v530
    %v614 = vcombine.low %v599, %v601
    %v616 = vunpack.c.l.s4 1966171168
    %v617 = vunpack.c.0.s8 %v616
    %v618 = vlaneseq
    %v619 = vshrl.u32 %v618, 7
    %v620 = vsub.s32 %v617, %v619
    %v621 = vrot.slane %v611, %v620
    %v623 = vunpack.c.l.s4 1966171168
    %v624 = vunpack.c.0.s8 %v623
    %v625 = vlaneseq
    %v626 = vshrl.u32 %v625, 7
    %v627 = vsub.s32 %v624, %v626
    %v628 = vrot.slane %v612, %v627
    %v630 = vunpack.c.l.s4 1966171168
    %v631 = vunpack.c.0.s8 %v630
    %v632 = vlaneseq
    %v633 = vshrl.u32 %v632, 7
    %v634 = vsub.s32 %v631, %v633
    %v635 = vrot.slane %v613, %v634
    %v637 = vunpack.c.l.s4 1966171168
    %v638 = vunpack.c.0.s8 %v637
    %v639 = vlaneseq
    %v640 = vshrl.u32 %v639, 7
    %v641 = vsub.s32 %v638, %v640
    %v642 = vrot.slane %v614, %v641
    %v643 = vcombine.low %v621, %v628
    %v644 = vcombine.low %v635, %v642
    %v646 = vunpack.c.l.s4 1966171168
    %v647 = vunpack.c.0.s8 %v646
    %v648 = vlaneseq
    %v649 = vshrl.u32 %v648, 7
    %v650 = vsub.s32 %v647, %v649
    %v651 = vrot.slane %v643, %v650
    %v653 = vunpack.c.l.s4 1966171168
    %v654 = vunpack.c.0.s8 %v653
    %v655 = vlaneseq
    %v656 = vshrl.u32 %v655, 7
    %v657 = vsub.s32 %v654, %v656
    %v658 = vrot.slane %v644, %v657
    %v659 = vcombine.low %v651, %v658
    %661 = vst [vmem:[#allocation8] sm:$0xff] %v659
    // Predicated region
    $region34: #{tpu_custom_call.1} parent=1 // pred_check
      _
    $region35: #{tpu_custom_call.1} parent=1 // pred_check_branch
      %663 = sbr.rel (0) target = $region37
    $region36: #{tpu_custom_call.1} parent=1 // pred_region
      %s665 = ssub.s32 128, 128
      %666 = vsyncadd [#allocation4], %s665
      %s668 = sshll.u32 [#allocation8], 4
      %s669 = int_to_ptr.vmem [resolvable:$true] %s668
      %671 = dma.vmem_to_hbm [thread:$0]  %s669, 128, %s5, [#allocation4]
    $region37: #{tpu_custom_call.1} parent=1 // pred_fallthru
      _
    // Predicated region
    $region38: #{tpu_custom_call.1} parent=1 // pred_check
      _
    $region39: #{tpu_custom_call.1} parent=1 // pred_check_branch
      %673 = sbr.rel (0) target = $region41
    $region40: #{tpu_custom_call.1} parent=1 // pred_region
      %674 = dma.done [#allocation4], 128
    $region41: #{tpu_custom_call.1} parent=1 // pred_fallthru
      _
    %675 = vsyncpa [#allocation3], 1
    %676 = vsyncpa [#allocation6], 1
    %677 = vsyncpa [#allocation4], 1

</llo_original>
